<compile_context>
chip_gen: v7x
topology: tpu7x:2x2x1
jax: 0.10.0
libtpu: 0.0.40
codegen_flags: <defaults>
</compile_context>

<pallas_src>
import functools

import jax
import jax.numpy as jnp
from jax.experimental import pallas as pl
from jax.experimental.pallas import tpu as pltpu

_LANE = 128


def _pad_up(x, m):
    return ((x + m - 1) // m) * m


def _vmem_capacity_bytes():
    """Per-core VMEM capacity; falls back to the smallest current part (v7x)."""
    try:
        cap = int(pltpu.get_tpu_info().vmem_capacity_bytes)
        return max(cap, 16 * 1024 * 1024)
    except Exception:
        return 64 * 1024 * 1024


# --------------------------------------------------------------------------- #
# Kernels
# --------------------------------------------------------------------------- #
def _gram_partial_kernel(f_ref, g_ref):
    """Accumulate one shard's partial F @ F.T over its K tiles.

    grid = (num_shards, k_per_shard); axis 0 is "parallel" (sharded across
    TensorCores on megacore parts), axis 1 is the "arbitrary" reduction axis.
    g_ref is the resident (N, N) partial accumulator for this shard.
    """
    k = pl.program_id(1)

    @pl.when(k == 0)
    def _():
        g_ref[...] = jnp.zeros_like(g_ref)

    f = f_ref[...]
    # Contract both operands on their last (lane) dim -> F_tile @ F_tile.T with
    # no explicit transpose.  (If pl.lower_as_mlir ever shows a hidden per-step
    # vxpose here, switch to an explicit one-off transpose of the RHS tile.)
    g_ref[...] += jax.lax.dot_general(
        f, f, dimension_numbers=(((1,), (1,)), ((), ())),
        preferred_element_type=jnp.float32)


def _combine_gram_kernel(inv_total, parts_ref, g_ref):
    """G = sum(partials) / (a*b*c*d)."""
    g_ref[...] = jnp.sum(parts_ref[...], axis=0) * inv_total


def _combine_gram_mse_kernel(inv_total, inv_nn, parts_ref, t_ref, g_ref, loss_ref):
    """G = sum(partials) / (a*b*c*d); loss = mean((G - target)^2)."""
    g = jnp.sum(parts_ref[...], axis=0) * inv_total
    g_ref[...] = g
    diff = g - t_ref[...].astype(jnp.float32)
    loss_ref[...] = jnp.sum(diff * diff, axis=(0, 1), keepdims=True) * inv_nn


# --------------------------------------------------------------------------- #
# Tiling policy + drivers
# --------------------------------------------------------------------------- #
def _choose_k_tiling(M, m128, tk_cap, num_shards):
    """Pick (tk, nk): tk a 128-multiple <= tk_cap, nk a multiple of num_shards,
    minimizing padded columns tk*nk - m128 (prefer fewer/larger tiles)."""
    if num_shards == 1:
        # Single full-extent block: allowed even when M % 128 != 0, no padding.
        return M, 1
    nb = m128 // _LANE
    nk = _pad_up(max(num_shards, pl.cdiv(m128, tk_cap)), num_shards)
    nk_max = _pad_up(nb, num_shards)
    best = None
    while True:
        tk = _pad_up(pl.cdiv(m128, nk), _LANE)
        if tk <= tk_cap:
            pad = tk * nk - m128
            if best is None or pad < best[2]:
                best = (tk, nk, pad)
            if pad == 0:
                break
        if nk >= nk_max:
            break
        nk += num_shards
    return best[0], best[1]


def _gram_partials(features, *, max_tk=32768):
    """features: (N, M).  Returns unnormalized partial Gram sums of shape
    (num_shards, N, N) float32 whose sum over axis 0 equals F @ F.T."""
    N, M = features.shape
    itemsize = jnp.dtype(features.dtype).itemsize

    cap = _vmem_capacity_bytes()
    vmem_limit = int(cap * 0.85)     # scoped limit handed to the compiler
    tile_budget = int(cap * 0.70)    # what we actually size tiles against

    fixed = 2 * N * N * 4            # resident partial-G block (double-buffered)
    if fixed + 2 * N * _LANE * itemsize > tile_budget:
        # TODO(synk): add an N-tiled Gram path for very large a*b (N >~ 4000);
        # the resident (N, N) accumulator would not fit VMEM.
        raise ValueError(f"a*b = {N} is too large for a VMEM-resident Gram block")

    tk_cap = ((tile_budget - fixed) // (2 * N * itemsize)) // _LANE * _LANE
    tk_cap = max(_LANE, min(tk_cap, max_tk))

    m128 = _pad_up(M, _LANE)
    # Use both TensorCores on megacore parts whenever there are >= 2 lane groups;
    # on 1-TC chips the second shard simply runs sequentially (negligible cost).
    num_shards = 2 if m128 >= 2 * _LANE else 1

    tk, nk = _choose_k_tiling(M, m128, tk_cap, num_shards)
    m_pad = tk * nk
    k_per_shard = nk // num_shards

    feats = features
    if m_pad != M:
        # Zero columns contribute nothing to F @ F.T; normalization uses the
        # true a*b*c*d.  With the nk-first policy this pad is at most ~one lane
        # group, and is skipped entirely when M is already tile-aligned.
        feats = jnp.pad(features, ((0, 0), (0, m_pad - M)))

    return pl.pallas_call(
        _gram_partial_kernel,
        out_shape=jax.ShapeDtypeStruct((num_shards, N, N), jnp.float32),
        grid_spec=pltpu.PrefetchScalarGridSpec(
            num_scalar_prefetch=0,
            grid=(num_shards, k_per_shard),
            in_specs=[pl.BlockSpec((N, tk),
                                   lambda s, k: (0, s * k_per_shard + k))],
            out_specs=pl.BlockSpec((None, N, N), lambda s, k: (s, 0, 0)),
        ),
        compiler_params=pltpu.CompilerParams(
            dimension_semantics=("parallel", "arbitrary"),
            vmem_limit_bytes=vmem_limit),
    )(feats)


def gram_only(features, total_elems, *, max_tk=32768):
    """features: (N, M) -> G = (F @ F.T) / total_elems, shape (N, N) float32."""
    N = features.shape[0]
    parts = _gram_partials(features, max_tk=max_tk)
    kernel = functools.partial(_combine_gram_kernel, 1.0 / float(total_elems))
    return pl.pallas_call(
        kernel,
        out_shape=jax.ShapeDtypeStruct((N, N), jnp.float32),
    )(parts)


def gram_and_mse(features, target_G, total_elems, *, max_tk=32768):
    """features: (N, M); target_G: (N, N) f32 -> (G (N,N) f32, loss (1,1) f32)."""
    N = features.shape[0]
    parts = _gram_partials(features, max_tk=max_tk)
    kernel = functools.partial(_combine_gram_mse_kernel,
                               1.0 / float(total_elems), 1.0 / float(N * N))
    return pl.pallas_call(
        kernel,
        out_shape=(jax.ShapeDtypeStruct((N, N), jnp.float32),
                   jax.ShapeDtypeStruct((1, 1), jnp.float32)),
    )(parts, target_G)


def gram_matrix(x_nchw):
    """Pallas-backed gram matrix of an NCHW feature map."""
    a, b, c, d = x_nchw.shape
    feats = x_nchw.reshape(a * b, c * d)
    return gram_only(feats, a * b * c * d)


class StyleLoss:
    """JAX/Pallas port of the PyTorch StyleLoss module."""

    def __init__(self, target_feature):
        # "detach" is implicit: target is a concrete array computed once.
        self.target = gram_matrix(target_feature)
        self.loss = None

    def __call__(self, x):
        # TODO(synk): self.loss as a Python side effect is eager-only (as in
        # PyTorch); it will not round-trip through jit/grad tracing.
        a, b, c, d = x.shape
        feats = x.reshape(a * b, c * d)
        _, loss = gram_and_mse(feats, self.target, a * b * c * d)
        self.loss = loss[0, 0]
        return x  # forward returns the input unchanged


if __name__ == "__main__":
    key = jax.random.PRNGKey(0)
    k_t, k_x, k_t2, k_x2 = jax.random.split(key, 4)

    def ref_gram(v):
        a, b, c, d = v.shape
        f = v.reshape(a * b, c * d)
        return (f @ f.T) / (a * b * c * d)

    # --- case 1: NCHW batch=2, channels=4, H=W=16 -> features (8, 256) ---
    target_feature = jax.random.normal(k_t, (2, 4, 16, 16), dtype=jnp.float32)
    x = jax.random.normal(k_x, (2, 4, 16, 16), dtype=jnp.float32)

    module = StyleLoss(target_feature)
    out = module(x)
    jax.block_until_ready(out)
    jax.block_until_ready(module.loss)

    ref_loss = jnp.mean((ref_gram(x) - ref_gram(target_feature)) ** 2)
    assert jnp.allclose(module.loss, ref_loss, rtol=1e-5, atol=1e-5)
    assert out.shape == x.shape

    # --- case 2: non-128-multiple spatial (H=W=14) exercises the pad path ---
    target_feature2 = jax.random.normal(k_t2, (1, 8, 14, 14), dtype=jnp.float32)
    x2 = jax.random.normal(k_x2, (1, 8, 14, 14), dtype=jnp.float32)

    module2 = StyleLoss(target_feature2)
    out2 = module2(x2)
    jax.block_until_ready(out2)
    jax.block_until_ready(module2.loss)

    ref_loss2 = jnp.mean((ref_gram(x2) - ref_gram(target_feature2)) ** 2)
    assert jnp.allclose(module2.loss, ref_loss2, rtol=1e-5, atol=1e-5)
    assert out2.shape == x2.shape

    print("KERNEL_OK")
</pallas_src>

<mosaic_0001>
module attributes {stable_mosaic.version = 11 : i64} {
  func.func @_gram_partial_kernel(%arg0: i32, %arg1: i32, %arg2: memref<8x128xf32, #tpu.memory_space<vmem>>, %arg3: memref<1x8x8xf32, #tpu.memory_space<vmem>>) attributes {dimension_semantics = [#tpu.dimension_semantics<parallel>, #tpu.dimension_semantics<arbitrary>], iteration_bounds = array<i64: 2, 1>, scalar_prefetch = 0 : i64, scratch_operands = 0 : i64, tpu.core_type = #tpu.core_type<tc>, window_params = [{transform_indices = @transform_0, window_bounds = array<i64: 8, 128>}, {transform_indices = @transform_1, window_bounds = array<i64: 1, 8, 8>}]} {
    %c0_i32 = arith.constant 0 : i32
    %0 = arith.cmpi eq, %arg1, %c0_i32 : i32
    %1 = arith.extui %0 : i1 to i32
    %c0_i32_0 = arith.constant 0 : i32
    %2 = arith.cmpi ne, %1, %c0_i32_0 : i32
    scf.if %2 {
      %cst_8 = arith.constant 0.000000e+00 : f32
      %11 = vector.broadcast %cst_8 : f32 to vector<8x8xf32>
      %c0_9 = arith.constant 0 : index
      %c0_10 = arith.constant 0 : index
      %c0_11 = arith.constant 0 : index
      %12 = vector.load %arg3[%c0_9, %c0_10, %c0_11] : memref<1x8x8xf32, #tpu.memory_space<vmem>>, vector<1x8x8xf32>
      %13 = vector.shape_cast %12 : vector<1x8x8xf32> to vector<8x8xf32>
      %14 = vector.shape_cast %11 : vector<8x8xf32> to vector<1x8x8xf32>
      tpu.vector_store %arg3[%c0_9, %c0_10, %c0_11], %14 {strides = array<i32>} : memref<1x8x8xf32, #tpu.memory_space<vmem>>, vector<1x8x8xf32>,
    } else {
    }
    %c0 = arith.constant 0 : index
    %c0_1 = arith.constant 0 : index
    %3 = vector.load %arg2[%c0, %c0_1] : memref<8x128xf32, #tpu.memory_space<vmem>>, vector<8x128xf32>
    %c0_2 = arith.constant 0 : index
    %c0_3 = arith.constant 0 : index
    %c0_4 = arith.constant 0 : index
    %4 = vector.load %arg3[%c0_2, %c0_3, %c0_4] : memref<1x8x8xf32, #tpu.memory_space<vmem>>, vector<1x8x8xf32>
    %5 = vector.shape_cast %4 : vector<1x8x8xf32> to vector<8x8xf32>
    %cst = arith.constant dense<0.000000e+00> : vector<8x8xf32>
    %6 = tpu.matmul %3, %3, %cst {dimension_numbers = #tpu.dot_dimension_numbers<[1], [1], [0], [0], [0, 0, 1, 0], [], []>} : vector<8x128xf32>, vector<8x128xf32>, vector<8x8xf32> -> vector<8x8xf32>
    %7 = arith.addf %5, %6 : vector<8x8xf32>
    %c0_5 = arith.constant 0 : index
    %c0_6 = arith.constant 0 : index
    %c0_7 = arith.constant 0 : index
    %8 = vector.load %arg3[%c0_5, %c0_6, %c0_7] : memref<1x8x8xf32, #tpu.memory_space<vmem>>, vector<1x8x8xf32>
    %9 = vector.shape_cast %8 : vector<1x8x8xf32> to vector<8x8xf32>
    %10 = vector.shape_cast %7 : vector<8x8xf32> to vector<1x8x8xf32>
    tpu.vector_store %arg3[%c0_5, %c0_6, %c0_7], %10 {strides = array<i32>} : memref<1x8x8xf32, #tpu.memory_space<vmem>>, vector<1x8x8xf32>,
    return
  }
  func.func @transform_0(%arg0: i32, %arg1: i32) -> (i32, i32) {
    %c1_i32 = arith.constant 1 : i32
    %0 = arith.muli %arg0, %c1_i32 : i32
    %1 = arith.addi %0, %arg1 : i32
    %c0_i32 = arith.constant 0 : i32
    %c0_i32_0 = arith.constant 0 : i32
    return %c0_i32, %1 : i32, i32
  }
  func.func @transform_1(%arg0: i32, %arg1: i32) -> (i32, i32, i32) {
    %c0_i32 = arith.constant 0 : i32
    %c0_i32_0 = arith.constant 0 : i32
    %c0_i32_1 = arith.constant 0 : i32
    return %arg0, %c0_i32, %c0_i32_0 : i32, i32, i32
  }
}

</mosaic_0001>

<llo_original>
// kernel: tpu_custom_call.1
$region0: #{tpu_custom_call.1}
  #allocation0 [shape = 'u32[]', space=smem, size = 0x4, offset = 0x4, fixed_abs, tag = 'smem constant byte address 0x4 - core index']
  #allocation1 [shape = 'u32[144,128]{1,0:T(1,128)}', space=vmem, size = 0x12000, scoped, tag = 'internal scratch']
  %s0 = inlined_call_operand.hbm [shape: f32[8,256], index: 0, kind: input, shape index: {}]
  %s1 = inlined_call_operand.hbm [shape: f32[2,8,8], index: 1, kind: output, shape index: {}]
  %s2 = sld [smem:[#allocation0]]
  $region45: #{tpu_custom_call.1} parent=0
    _
  %s4 = ssub.s32 1, %s2
  %s5 = scalar_select 0, %s4, %s2
  $region1: #{tpu_custom_call.1} parent=0
    #allocation2 [shape = 'u8[8192]{0}', space=vmem, size = 0x2000, scoped, tag = 'input window, operand 0']
    #allocation3 [shape = 's32[2]{0}', space=sflag, size = 0x8, scoped, tag = 'scoped memory for tpu_custom_call.1']
    #allocation4 [shape = 's32[2]{0}', space=sflag, size = 0x8, scoped, tag = 'scoped memory for tpu_custom_call.1']
    #allocation5 [shape = 'u8[8192]{0}', space=vmem, size = 0x2000, scoped, tag = 'output window, operand 0']
    %6 = vsyncpa [#allocation3], 0
    %s7 = scalar_lea.sflag [#allocation3], 1
    %8 = vsyncpa %s7, 0
    %9 = vsyncpa [#allocation4], 0
    %s10 = scalar_lea.sflag [#allocation4], 1
    %11 = vsyncpa %s10, 0
    loop: start=0, step=1, limit=4
    $region2: #{tpu_custom_call.1} parent=1 // loop_pre_header
      _
    $region3: #{tpu_custom_call.1} parent=1 // loop_header
      %s13 = sphi 0, %s17
      %p14 = scmp.ge.s32.totalorder %s13, 4
      %s20 = sphi 0, %s32
      %s21 = sphi 0, %s28
      %s22 = sphi 0, %s20
      %s23 = sphi 0, %s21
      %s24 = sphi 0, %s22
      %s25 = sphi 0, %s23
      %s37 = sphi 0, %s39
      %s40 = sphi 0, %s37
      %s41 = sphi 0, %s40
      %s57 = sphi 0, %s41
      %s63 = sphi 0, %s65
      %s66 = sphi 0, %s63
      %s67 = sphi 0, %s66
      %s83 = sphi 0, %s67
    $region4: #{tpu_custom_call.1} parent=1 // loop_header_branch
      %16 = sbr.rel (%p14) target = $region8
    $region5: #{tpu_custom_call.1} parent=1 // loop_body
      %s18 = ssub.s32 %s13, 1
      %s19 = ssub.s32 %s13, 2
      %s26 = sadd.s32 1, %s21
      %p27 = scmp.ge.s32.totalorder %s26, 1
      %s28 = scalar_select %p27, 0, %s26
      %s29 = sadd.s32 1, %s20
      %s30 = scalar_select %p27, %s29, %s20
      %p31 = scmp.ge.s32.totalorder %s30, 2
      %s32 = scalar_select %p31, 0, %s30
      %s33 = sadd.s32 %s20, %s21
      %s34 = sadd.s32 %s32, %s28
      %s35 = ssub.s32 %s33, %s34
      %p36 = scmp.eq.s32.totalorder %s35, 0
      %s38 = sadd.s32 %s37, 1
      %s39 = scalar_select %p36, %s37, %s38
      %p42 = pneg %p36
      %p43 = scmp.eq.s32.totalorder %s13, 1
      %p44 = por %p42, %p43
      %p45 = scmp.ne.s32.totalorder %s37, %s40
      %p46 = scmp.eq.s32.totalorder %s13, 0
      %p47 = por %p45, %p46
      %p48 = scmp.ne.s32.totalorder %s37, %s40
      %p49 = scmp.eq.s32.totalorder %s18, 1
      %p50 = por %p48, %p49
      %p51 = scmp.ne.s32.totalorder %s40, %s41
      %p52 = scmp.eq.s32.totalorder %s18, 0
      %p53 = por %p51, %p52
      %p54 = scmp.ne.s32.totalorder %s40, %s41
      %p55 = scmp.eq.s32.totalorder %s19, 1
      %p56 = por %p54, %p55
      %p58 = scmp.ne.s32.totalorder %s41, %s57
      %p59 = scmp.eq.s32.totalorder %s19, 0
      %p60 = por %p58, %p59
      %s61 = ssub.s32 %s20, %s32
      %p62 = scmp.eq.s32.totalorder %s61, 0
      %s64 = sadd.s32 %s63, 1
      %s65 = scalar_select %p62, %s63, %s64
      %p68 = pneg %p62
      %p69 = scmp.eq.s32.totalorder %s13, 1
      %p70 = por %p68, %p69
      %p71 = scmp.ne.s32.totalorder %s63, %s66
      %p72 = scmp.eq.s32.totalorder %s13, 0
      %p73 = por %p71, %p72
      %p74 = scmp.ne.s32.totalorder %s63, %s66
      %p75 = scmp.eq.s32.totalorder %s18, 1
      %p76 = por %p74, %p75
      %p77 = scmp.ne.s32.totalorder %s66, %s67
      %p78 = scmp.eq.s32.totalorder %s18, 0
      %p79 = por %p77, %p78
      %p80 = scmp.ne.s32.totalorder %s66, %s67
      %p81 = scmp.eq.s32.totalorder %s19, 1
      %p82 = por %p80, %p81
      %p84 = scmp.ne.s32.totalorder %s67, %s83
      %p85 = scmp.eq.s32.totalorder %s19, 0
      %p86 = por %p84, %p85
      %p87 = scmp.le.s32.totalorder 1, %s13
      %p88 = scmp.lt.s32.totalorder %s13, 3
      %p89 = pnand %p87, %p88
      %p90 = pneg %p89
      // Predicated region
      $region9: #{tpu_custom_call.1} parent=5 // pred_check
        _
      $region10: #{tpu_custom_call.1} parent=5 // pred_check_branch
        %92 = sbr.rel (%p89) target = $region12
      $region11: #{tpu_custom_call.1} parent=5 // pred_region
        %s93 = ssub.s32 %s13, 1
      $region12: #{tpu_custom_call.1} parent=5 // pred_fallthru
        _
      %p94 = scmp.lt.s32.totalorder %s13, 2
      // Predicated region
      $region13: #{tpu_custom_call.1} parent=5 // pred_check
        %p95 = pneg %p94
      $region14: #{tpu_custom_call.1} parent=5 // pred_check_branch
        %97 = sbr.rel (%p95) target = $region16
      $region15: #{tpu_custom_call.1} parent=5 // pred_region
        // Predicated region
        $region17: #{tpu_custom_call.1} parent=15 // pred_check
          %p98 = pneg %p47
        $region18: #{tpu_custom_call.1} parent=15 // pred_check_branch
          %100 = sbr.rel (%p98) target = $region20
        $region19: #{tpu_custom_call.1} parent=15 // pred_region
          %s101 = sand.u32 %s37, 1
          %s102 = scalar_lea.sflag [#allocation3], %s101
          %s103 = sand.u32 %s37, 1
          %s104 = smul.addr %s103, 8
          %s105 = scalar_lea.vmem [#allocation2], %s104
          %s106 = sadd.s32 %s20, %s21
          %s108 = ssub.s32 128, 128
          %109 = vsyncadd %s102, %s108
          %s110 = smul.addr %s106, 128
          %s111 = scalar_lea.hbm %s0, %s110
          %s113 = sshll.u32 %s105, 4
          %s114 = int_to_ptr.vmem [resolvable:$true] %s113
          %116 = dma.hbm_to_vmem [thread:$0]  %s111, 128, %s114, %s102
        $region20: #{tpu_custom_call.1} parent=15 // pred_fallthru
          _
      $region16: #{tpu_custom_call.1} parent=5 // pred_fallthru
        _
      %p117 = scmp.le.s32.totalorder 1, %s13
      %p118 = scmp.lt.s32.totalorder %s13, 3
      %p119 = pnand %p117, %p118
      %p120 = pneg %p119
      // Predicated region
      $region21: #{tpu_custom_call.1} parent=5 // pred_check
        _
      $region22: #{tpu_custom_call.1} parent=5 // pred_check_branch
        %122 = sbr.rel (%p119) target = $region24
      $region23: #{tpu_custom_call.1} parent=5 // pred_region
        %s123 = ssub.s32 %s13, 1
        %s124 = sand.u32 %s40, 1
        %s125 = scalar_lea.sflag [#allocation3], %s124
        %s126 = sand.u32 %s40, 1
        %s127 = smul.addr %s126, 8
        %s128 = scalar_lea.vmem [#allocation2], %s127
        // Predicated region
        $region25: #{tpu_custom_call.1} parent=23 // pred_check
          %p129 = pneg %p53
        $region26: #{tpu_custom_call.1} parent=23 // pred_check_branch
          %131 = sbr.rel (%p129) target = $region28
        $region27: #{tpu_custom_call.1} parent=23 // pred_region
          %132 = dma.done %s125, 128
        $region28: #{tpu_custom_call.1} parent=23 // pred_fallthru
          _
        %s133 = sand.u32 %s40, 1
        %s134 = scalar_lea.sflag [#allocation3], %s133
        %s135 = sand.u32 %s40, 1
        %s136 = smul.addr %s135, 8
        %s137 = scalar_lea.vmem [#allocation2], %s136
        %p138 = pneg %p53
        %p139 = pneg %p50
        %p140 = pneg %p79
        %p141 = pneg %p76
        %s142 = sand.u32 %s66, 1
        %s143 = scalar_lea.sflag [#allocation4], %s142
        %s144 = sand.u32 %s66, 1
        %s145 = smul.addr %s144, 8
        %s146 = scalar_lea.vmem [#allocation5], %s145
        %s147 = sadd.s32 %s22, %s23
        %p148 = scmp.eq.s32.totalorder %s23, 0
        // Predicated region
        $region29: #{tpu_custom_call.1} parent=23 // pred_check
          %p149 = pneg %p148
        $region30: #{tpu_custom_call.1} parent=23 // pred_check_branch
          %151 = sbr.rel (%p149) target = $region32
        $region31: #{tpu_custom_call.1} parent=23 // pred_region
          %vm152 = vcmask 64512
          %153 = vst.msk [vmem:[%s146] sm:$0xff] %vm152, 0.0
        $region32: #{tpu_custom_call.1} parent=23 // pred_fallthru
          _
        %v154 = vld [vmem:[%s128] sm:$0xff]
        %v155 = vld [vmem:[%s146] sm:$0xff]
        %156 = vmatprep.subr.mxu0 0.0
        %157 = vmatpush1.xpose.msra.mxu0 %v154
        %158 = vmatprep.subr.mxu0 0.0
        %159 = vmatpush1.xpose.msra.mxu0 0.0
        %160 = vmatprep.subr.mxu0 0.0
        %161 = vmatpush1.xpose.msra.mxu0 0.0
        %162 = vmatprep.subr.mxu0 0.0
        %163 = vmatpush1.xpose.msra.mxu0 0.0
        %164 = vmatprep.subr.mxu0 0.0
        %165 = vmatpush1.xpose.msra.mxu0 0.0
        %166 = vmatprep.subr.mxu0 0.0
        %167 = vmatpush1.xpose.msra.mxu0 0.0
        %168 = vmatprep.subr.mxu0 0.0
        %169 = vmatpush1.xpose.msra.mxu0 0.0
        %170 = vmatprep.subr.mxu0 0.0
        %171 = vmatpush1.xpose.msra.mxu0 0.0
        %172 = vmatprep.subr.mxu0 0.0
        %173 = vmatpush1.xpose.msra.mxu0 0.0
        %174 = vmatprep.subr.mxu0 0.0
        %175 = vmatpush1.xpose.msra.mxu0 0.0
        %176 = vmatprep.subr.mxu0 0.0
        %177 = vmatpush1.xpose.msra.mxu0 0.0
        %178 = vmatprep.subr.mxu0 0.0
        %179 = vmatpush1.xpose.msra.mxu0 0.0
        %180 = vmatprep.subr.mxu0 0.0
        %181 = vmatpush1.xpose.msra.mxu0 0.0
        %182 = vmatprep.subr.mxu0 0.0
        %183 = vmatpush1.xpose.msra.mxu0 0.0
        %184 = vmatprep.subr.mxu0 0.0
        %185 = vmatpush1.xpose.msra.mxu0 0.0
        %186 = vmatprep.subr.mxu0 0.0
        %187 = vmatpush1.xpose.msra.mxu0 0.0
        %188 = vmatprep.subr.mxu0 0.0
        %189 = vmatpush1.xpose.msra.mxu0 0.0
        %190 = vmatprep.subr.mxu0 0.0
        %191 = vmatpush1.xpose.msra.mxu0 0.0
        %192 = vmatprep.subr.mxu0 0.0
        %193 = vmatpush1.xpose.msra.mxu0 0.0
        %194 = vmatprep.subr.mxu0 0.0
        %195 = vmatpush1.xpose.msra.mxu0 0.0
        %196 = vmatprep.subr.mxu0 0.0
        %197 = vmatpush1.xpose.msra.mxu0 0.0
        %198 = vmatprep.subr.mxu0 0.0
        %199 = vmatpush1.xpose.msra.mxu0 0.0
        %200 = vmatprep.subr.mxu0 0.0
        %201 = vmatpush1.xpose.msra.mxu0 0.0
        %202 = vmatprep.subr.mxu0 0.0
        %203 = vmatpush1.xpose.msra.mxu0 0.0
        %204 = vmatprep.subr.mxu0 0.0
        %205 = vmatpush1.xpose.msra.mxu0 0.0
        %206 = vmatprep.subr.mxu0 0.0
        %207 = vmatpush1.xpose.msra.mxu0 0.0
        %208 = vmatprep.subr.mxu0 0.0
        %209 = vmatpush1.xpose.msra.mxu0 0.0
        %210 = vmatprep.subr.mxu0 0.0
        %211 = vmatpush1.xpose.msra.mxu0 0.0
        %212 = vmatprep.subr.mxu0 0.0
        %213 = vmatpush1.xpose.msra.mxu0 0.0
        %214 = vmatprep.subr.mxu0 0.0
        %215 = vmatpush1.xpose.msra.mxu0 0.0
        %216 = vmatprep.subr.mxu0 0.0
        %217 = vmatpush1.xpose.msra.mxu0 0.0
        %218 = vmatprep.subr.mxu0 0.0
        %219 = vmatpush1.xpose.msra.mxu0 0.0
        %220 = vmatprep.mubr.f32.mxu0 0.0
        %221 = vmatmul.mubr.f32.gmra.mrb[0].mxu0 %v154
        %v222 = vpop.f32.mrb[0].mxu0
        %v223 = vadd.f32 0.0, %v222
        %v224 = vpop.f32.mrb[0].mxu0
        %225 = vdwg.mxu0
        %v226 = vadd.f32 %v155, %v223
        %vm227 = vcmask 64512
        %228 = vst.msk [vmem:[%s146] sm:$0xff] %vm227, %v226
        %s229 = sand.u32 %s66, 1
        %s230 = scalar_lea.sflag [#allocation4], %s229
        %s231 = sand.u32 %s66, 1
        %s232 = smul.addr %s231, 8
        %s233 = scalar_lea.vmem [#allocation5], %s232
        // Predicated region
        $region33: #{tpu_custom_call.1} parent=23 // pred_check
          %p234 = pneg %p76
        $region34: #{tpu_custom_call.1} parent=23 // pred_check_branch
          %236 = sbr.rel (%p234) target = $region36
        $region35: #{tpu_custom_call.1} parent=23 // pred_region
          %s238 = ssub.s32 128, 128
          %239 = vsyncadd %s230, %s238
          %s240 = smul.addr %s22, 128
          %s241 = scalar_lea.hbm %s1, %s240
          %s243 = sshll.u32 %s233, 4
          %s244 = int_to_ptr.vmem [resolvable:$true] %s243
          %246 = dma.vmem_to_hbm [thread:$0]  %s244, 128, %s241, %s230
        $region36: #{tpu_custom_call.1} parent=23 // pred_fallthru
          _
      $region24: #{tpu_custom_call.1} parent=5 // pred_fallthru
        _
      %p247 = scmp.le.s32.totalorder 2, %s13
      // Predicated region
      $region37: #{tpu_custom_call.1} parent=5 // pred_check
        %p248 = pneg %p247
      $region38: #{tpu_custom_call.1} parent=5 // pred_check_branch
        %250 = sbr.rel (%p248) target = $region40
      $region39: #{tpu_custom_call.1} parent=5 // pred_region
        %s251 = ssub.s32 %s13, 2
        // Predicated region
        $region41: #{tpu_custom_call.1} parent=39 // pred_check
          %p252 = pneg %p82
        $region42: #{tpu_custom_call.1} parent=39 // pred_check_branch
          %254 = sbr.rel (%p252) target = $region44
        $region43: #{tpu_custom_call.1} parent=39 // pred_region
          %s255 = sand.u32 %s67, 1
          %s256 = scalar_lea.sflag [#allocation4], %s255
          %s257 = sand.u32 %s67, 1
          %s258 = smul.addr %s257, 8
          %s259 = scalar_lea.vmem [#allocation5], %s258
          %260 = dma.done %s256, 128
        $region44: #{tpu_custom_call.1} parent=39 // pred_fallthru
          _
      $region40: #{tpu_custom_call.1} parent=5 // pred_fallthru
        _
    $region6: #{tpu_custom_call.1} parent=1 // loop_footer
      %s17 = sadd.s32 1, %s13
    $region7: #{tpu_custom_call.1} parent=1 // loop_footer_branch
      %12 = sbr.rel target = $region3
    $region8: #{tpu_custom_call.1} parent=1 // loop_exit
      _
    %261 = vsyncpa [#allocation3], 1
    %s262 = scalar_lea.sflag [#allocation3], 1
    %263 = vsyncpa %s262, 1
    %264 = vsyncpa [#allocation4], 1
    %s265 = scalar_lea.sflag [#allocation4], 1
    %266 = vsyncpa %s265, 1

</llo_original>
